<compile_context>
chip_gen: v5e
topology: v5e:2x2
jax: 0.10.0
libtpu: 0.0.40
codegen_flags: <defaults>
</compile_context>

<pallas_src>
import functools

import jax
import jax.numpy as jnp
from jax.experimental import pallas as pl
from jax.experimental.pallas import tpu as pltpu


def _copy_kernel(x_ref, o_ref):
    # Pure lane-dense copy; the reshape already happened (for free) outside.
    o_ref[...] = x_ref[...]


# Below this size a single whole-array block is used (fixed launch/DMA
# overhead dominates; a grid would only add per-step overhead).
_SMALL_BYTES = 512 * 1024


@functools.lru_cache(maxsize=None)
def _tile_budget_bytes():
    """Per-tile byte budget. 4 double-buffered tiles (2 in + 2 out) must fit
    the scoped-VMEM default of the generation (16 MiB v5e, 32 MiB v6e/v7x)."""
    try:
        kind = jax.devices()[0].device_kind.lower()
    except Exception:  # pragma: no cover - defensive
        kind = ""
    if "v7" in kind or "tpu7" in kind:
        return 6 * 1024 * 1024   # 24 MiB working set < 32 MiB scoped default
    if "v6" in kind or "tpu6" in kind:
        return 4 * 1024 * 1024   # 16 MiB working set < 32 MiB
    return 2 * 1024 * 1024       # v5e & unknown: 8 MiB working set < 16 MiB


def _flatten_impl(x, *, tile_bytes, alias):
    n = x.shape[0]
    flat = 1
    for d in x.shape[1:]:
        flat *= d
    itemsize = x.dtype.itemsize
    total = n * flat
    total_bytes = total * itemsize
    out_2d = jax.ShapeDtypeStruct((n, flat), x.dtype)
    io_alias = {0: 0} if alias else {}
    cost = pl.CostEstimate(flops=0, transcendentals=0,
                           bytes_accessed=2 * total_bytes)

    # --- Small inputs: one whole-array lane-dense block, grid-less. ---------
    if total_bytes <= _SMALL_BYTES:
        x2 = jnp.reshape(x, (n, flat))
        return pl.pallas_call(
            _copy_kernel,
            out_shape=out_2d,
            in_specs=[pl.BlockSpec((n, flat), lambda: (0, 0))],
            out_specs=pl.BlockSpec((n, flat), lambda: (0, 0)),
            input_output_aliases=io_alias,
            cost_estimate=cost,
        )(x2)

    # --- Main path: retile over the TOTAL flattened buffer. -----------------
    if total % 128 == 0:
        rows = total // 128                    # >= 1024 given the small gate
        xr = jnp.reshape(x, (rows, 128))       # metadata-only (contiguous)
        bn = min(max(32, tile_bytes // (128 * itemsize)), rows)
        bn = max(32, (bn // 32) * 32)          # sublane-pack friendly
        grid = (pl.cdiv(rows, bn),)            # cdiv: tail block is masked
        y = pl.pallas_call(
            _copy_kernel,
            out_shape=jax.ShapeDtypeStruct((rows, 128), x.dtype),
            grid=grid,
            in_specs=[pl.BlockSpec((bn, 128), lambda i: (i, 0))],
            out_specs=pl.BlockSpec((bn, 128), lambda i: (i, 0)),
            input_output_aliases=io_alias,
            cost_estimate=cost,
            compiler_params=pltpu.CompilerParams(
                dimension_semantics=("parallel",)),
        )(xr)
        return jnp.reshape(y, (n, flat))

    # --- Ragged path: total not a multiple of 128 but large. Present as
    # (n, flat) with cdiv grids; only the tail blocks pay masked stores, and
    # no whole-array VMEM block is ever created. -----------------------------
    x2 = jnp.reshape(x, (n, flat))
    row_bytes = flat * itemsize
    if n >= 8 and 8 * row_bytes <= tile_bytes:
        bn = min((tile_bytes // row_bytes) // 8 * 8, (n // 8) * 8)
        bn = max(8, bn)
        bf = flat                              # full (ragged) lane extent
    else:
        bn = n if n < 8 else 8
        bf = max(128, (tile_bytes // (bn * itemsize)) // 128 * 128)
        if flat >= 128:
            bf = min(bf, (flat // 128) * 128)
        else:
            bf = flat
    grid = (pl.cdiv(n, bn), pl.cdiv(flat, bf))
    return pl.pallas_call(
        _copy_kernel,
        out_shape=out_2d,
        grid=grid,
        in_specs=[pl.BlockSpec((bn, bf), lambda i, j: (i, j))],
        out_specs=pl.BlockSpec((bn, bf), lambda i, j: (i, j)),
        input_output_aliases=io_alias,
        cost_estimate=cost,
        compiler_params=pltpu.CompilerParams(
            dimension_semantics=("parallel", "parallel")),
    )(x2)


_flatten_keep = jax.jit(_flatten_impl, static_argnames=("tile_bytes", "alias"))
_flatten_donate = jax.jit(_flatten_impl, static_argnames=("tile_bytes", "alias"),
                          donate_argnums=(0,))


def flatten(x, donate_input=False):
    """Pallas equivalent of Flatten.forward: x.view(x.size(0), -1).

    donate_input=True donates x and aliases its HBM buffer to the output
    (the caller must not use x afterwards); default keeps x intact."""
    tile_bytes = _tile_budget_bytes()
    if donate_input:
        return _flatten_donate(x, tile_bytes=tile_bytes, alias=True)
    return _flatten_keep(x, tile_bytes=tile_bytes, alias=False)


if __name__ == "__main__":
    key = jax.random.PRNGKey(0)

    # 1) Small NCHW input (as a conv layer would produce) -> whole-array path.
    x = jax.random.normal(key, (2, 4, 16, 16), dtype=jnp.float32)
    out = flatten(x)
    jax.block_until_ready(out)
    ref = x.reshape(x.shape[0], -1)
    assert out.shape == (2, 4 * 16 * 16), out.shape
    assert out.dtype == x.dtype
    assert jnp.array_equal(out, ref)

    # 2) 1 MiB input -> total-buffer (rows, 128) tiled, pipelined path.
    y = jax.random.normal(jax.random.PRNGKey(0), (8, 32, 32, 32),
                          dtype=jnp.float32)
    out2 = flatten(y)
    jax.block_until_ready(out2)
    ref2 = y.reshape(y.shape[0], -1)
    assert out2.shape == (8, 32 * 32 * 32), out2.shape
    assert out2.dtype == y.dtype
    assert jnp.array_equal(out2, ref2)

    # 3) Donated-input path: the temporary's HBM buffer is reused for the
    #    output via input_output_aliases; the temp is never touched again.
    ref3 = ref2 * 2.0
    tmp = (y * 2.0).reshape(y.shape[0], -1)    # throwaway temporary
    out3 = flatten(tmp, donate_input=True)
    jax.block_until_ready(out3)
    del tmp
    assert out3.shape == ref3.shape
    assert jnp.array_equal(out3, ref3)

    print("KERNEL_OK")
</pallas_src>

<mosaic_0001>
module attributes {stable_mosaic.version = 11 : i64} {
  func.func @_copy_kernel(%arg0: memref<2x1024xf32, #tpu.memory_space<vmem>>, %arg1: memref<2x1024xf32, #tpu.memory_space<vmem>>) attributes {dimension_semantics = [], scalar_prefetch = 0 : i64, scratch_operands = 0 : i64, tpu.core_type = #tpu.core_type<tc>} {
    %c0 = arith.constant 0 : index
    %c0_0 = arith.constant 0 : index
    %0 = vector.load %arg0[%c0, %c0_0] : memref<2x1024xf32, #tpu.memory_space<vmem>>, vector<2x1024xf32>
    %c0_1 = arith.constant 0 : index
    %c0_2 = arith.constant 0 : index
    %1 = vector.load %arg1[%c0_1, %c0_2] : memref<2x1024xf32, #tpu.memory_space<vmem>>, vector<2x1024xf32>
    tpu.vector_store %arg1[%c0_1, %c0_2], %0 {strides = array<i32>} : memref<2x1024xf32, #tpu.memory_space<vmem>>, vector<2x1024xf32>,
    return
  }
}

</mosaic_0001>

<llo_original>
// kernel: _flatten_impl.1
$region0: #{_flatten_impl.1}
  #allocation0 [shape = 'u32[]', space=smem, size = 0x4, offset = 0x4, fixed_abs, tag = 'smem constant byte address 0x4 - core index']
  #allocation1 [shape = 'u32[72,128]{1,0:T(1,128)}', space=vmem, size = 0x9000, scoped, tag = 'internal scratch']
  %s0 = inlined_call_operand.vmem [shape: f32[2,1024], index: 0, kind: input, shape index: {}]
  %s1 = inlined_call_operand.hbm [shape: f32[2,1024], index: 1, kind: output, shape index: {}]
  %s2 = sld [smem:[#allocation0]]
  $region14: #{_flatten_impl.1} parent=0
    _
  %s4 = ssub.s32 1, %s2
  %s5 = scalar_select 0, %s4, %s2
  $region1: #{_flatten_impl.1} parent=0
    #allocation2 [shape = 'u8[8192]{0}', space=vmem, size = 0x2000, scoped, tag = 'output window, operand 0, single buffered']
    #allocation3 [shape = 's32[1]{0}', space=sflag, size = 0x4, scoped, tag = 'scoped memory for _flatten_impl.1']
    %6 = vsyncpa [#allocation3], 0
    // Predicated region
    $region2: #{_flatten_impl.1} parent=1 // pred_check
      _
    $region3: #{_flatten_impl.1} parent=1 // pred_check_branch
      %8 = sbr.rel (0) target = $region5
    $region4: #{_flatten_impl.1} parent=1 // pred_region
      _
    $region5: #{_flatten_impl.1} parent=1 // pred_fallthru
      _
    %v9 = vld [vmem:[%s0] sm:$0xff]
    %v10 = vld [vmem:[%s0 + $0x8] sm:$0xff]
    %11 = vst [vmem:[#allocation2] sm:$0xff] %v9
    %12 = vst [vmem:[#allocation2 + $0x8] sm:$0xff] %v10
    // Predicated region
    $region6: #{_flatten_impl.1} parent=1 // pred_check
      _
    $region7: #{_flatten_impl.1} parent=1 // pred_check_branch
      %14 = sbr.rel (0) target = $region9
    $region8: #{_flatten_impl.1} parent=1 // pred_region
      %16 = vsyncadd [#allocation3], 0
      %s18 = sshll.u32 [#allocation2], 4
      %s19 = int_to_ptr.vmem [resolvable:$true] %s18
      %s20 = sshll.u32 %s1, 4
      %s21 = int_to_ptr.hbm [resolvable:$true] %s20
      %23 = dma.vmem_to_hbm [thread:$0]  %s19, 256, %s21, [#allocation3]
    $region9: #{_flatten_impl.1} parent=1 // pred_fallthru
      _
    // Predicated region
    $region10: #{_flatten_impl.1} parent=1 // pred_check
      _
    $region11: #{_flatten_impl.1} parent=1 // pred_check_branch
      %25 = sbr.rel (0) target = $region13
    $region12: #{_flatten_impl.1} parent=1 // pred_region
      %27 = dma.done [#allocation3], 256
    $region13: #{_flatten_impl.1} parent=1 // pred_fallthru
      _
    %28 = vsyncpa [#allocation3], 1

</llo_original>
